<compile_context>
chip_gen: v5e
topology: v5e:2x2
jax: 0.10.0
libtpu: 0.0.40
codegen_flags: <defaults>
</compile_context>

<pallas_src>
import functools

import jax
import jax.numpy as jnp
from jax.experimental import pallas as pl
from jax.experimental.pallas import tpu as pltpu

# Pendulum-v0 dimensions (env not importable here; values fixed by the env spec)
STATE_DIM = 3
ACTION_DIM = 1
MAX_ACTION = 2.0

H1 = 400          # logical hidden sizes (match nn.Linear in the reference module)
H2 = 300
H1_PAD = 512      # tile-aligned (multiple of 128, and of 256 for v6e/v7x MXU)
H2_PAD = 384      # multiple of 128 (deliberately NOT 512: no compute benefit, +128 KB DMA)
ACTION_PAD = 128  # lane-dense output width (full unmasked vst); wrapper slices back


def actor_kernel(x_ref, w1_ref, b1_ref, w2_ref, b2_ref, w3_ref, b3_ref, o_ref,
                 *, max_action):
    x = x_ref[...]                          # [TB, 3]    f32
    w1 = w1_ref[...]                        # [3, H1P]   f32

    # ---- Layer 1: relu(x @ W1 + b1), K=3 -> VPU broadcast FMAs (skip the MXU) ----
    h1 = (x[:, 0:1] * w1[0:1, :]
          + x[:, 1:2] * w1[1:2, :]
          + x[:, 2:3] * w1[2:3, :]
          + b1_ref[...])
    h1 = jnp.maximum(h1, 0.0)               # [TB, H1P] f32

    # ---- Layer 2: relu(h1 @ W2 + b2) -- bf16 operands, f32 accumulation on MXU ----
    h2 = jnp.dot(h1.astype(jnp.bfloat16), w2_ref[...],
                 preferred_element_type=jnp.float32)
    h2 = jnp.maximum(h2 + b2_ref[...], 0.0)  # [TB, H2P] f32

    # ---- Layer 3 (N=1): VPU multiply + XLU lane reduce; no MXU, no padded w3 DMA ----
    h3 = jnp.sum(h2 * w3_ref[...], axis=-1, keepdims=True) + b3_ref[...]  # [TB, 1] f32
    act = jnp.tanh(h3) * max_action

    # Lane-dense (unmasked) store: broadcast the single action lane across the padded width.
    o_ref[...] = jnp.broadcast_to(act, o_ref.shape).astype(o_ref.dtype)


def _batch_tile(batch):
    """Batch tile: whole batch for small inference batches, large tiles for training batches."""
    if batch <= 256:
        return batch
    for tb in (1024, 512, 256):
        if batch % tb == 0:
            return tb
    return batch


def actor_forward(x, params, max_action=MAX_ACTION, action_dim=ACTION_DIM):
    w1, b1, w2, b2, w3, b3 = params
    batch, state_dim = x.shape
    tb = _batch_tile(batch)
    grid = (batch // tb,)

    def const_spec(arr):
        # Constant block index across the batch grid -> weights fetched once, VMEM-resident.
        return pl.BlockSpec(arr.shape, lambda i: (0, 0))

    kernel = functools.partial(actor_kernel, max_action=max_action)
    out_padded = pl.pallas_call(
        kernel,
        out_shape=jax.ShapeDtypeStruct((batch, ACTION_PAD), jnp.float32),
        grid=grid,
        in_specs=[
            pl.BlockSpec((tb, state_dim), lambda i: (i, 0)),
            const_spec(w1), const_spec(b1),
            const_spec(w2), const_spec(b2),
            const_spec(w3), const_spec(b3),
        ],
        out_specs=pl.BlockSpec((tb, ACTION_PAD), lambda i: (i, 0)),
        compiler_params=pltpu.CompilerParams(
            dimension_semantics=("parallel",)),   # splits batch tiles across v7x's two TCs
    )(x, w1, b1, w2, b2, w3, b3)
    return out_padded[:, :action_dim]


def init_params(key, state_dim=STATE_DIM, action_dim=ACTION_DIM):
    """Synthetic init matching PyTorch nn.Linear uniform fan-in scaling.

    Logical weights are [in, out] (transposed vs nn.Linear.weight), then zero-padded to
    tile-aligned shapes.  w2 is stored as bfloat16 (it dominates the DMA); w1, w3 and all
    biases stay float32.  w3 is stored as a [1, H2_PAD] row for the VPU/XLU layer-3 path.
    """
    assert action_dim == 1, "layer-3 VPU/XLU reduce path assumes action_dim == 1"
    # TODO(synk): for action_dim > 1, fall back to a small padded matmul for layer 3.
    ks = jax.random.split(key, 6)

    def uni(k, shape, fan_in):
        bound = 1.0 / jnp.sqrt(fan_in)
        return jax.random.uniform(k, shape, jnp.float32, -bound, bound)

    w1 = uni(ks[0], (state_dim, H1), state_dim)
    b1 = uni(ks[1], (1, H1), state_dim)
    w2 = uni(ks[2], (H1, H2), H1)
    b2 = uni(ks[3], (1, H2), H1)
    w3 = uni(ks[4], (H2, action_dim), H2)
    b3 = uni(ks[5], (1, action_dim), H2)

    def pad(a, rows, cols):
        return jnp.pad(a, ((0, rows - a.shape[0]), (0, cols - a.shape[1])))

    w1p = pad(w1, state_dim, H1_PAD)                      # [3, 512]   f32
    b1p = pad(b1, 1, H1_PAD)                              # [1, 512]   f32
    w2p = pad(w2, H1_PAD, H2_PAD).astype(jnp.bfloat16)    # [512, 384] bf16
    b2p = pad(b2, 1, H2_PAD)                              # [1, 384]   f32
    w3p = pad(w3.T, 1, H2_PAD)                            # [1, 384]   f32 row
    b3p = b3                                              # [1, 1]     f32
    return (w1p, b1p, w2p, b2p, w3p, b3p)


def actor_reference_mirrored(x, params, max_action=MAX_ACTION, action_dim=ACTION_DIM):
    """Pure-JAX reference mirroring the kernel's dtype path (bf16 MXU operands, f32 acc)."""
    w1, b1, w2, b2, w3, b3 = params
    h1 = jnp.maximum(x[:, 0:1] * w1[0:1, :] + x[:, 1:2] * w1[1:2, :]
                     + x[:, 2:3] * w1[2:3, :] + b1, 0.0)
    h2 = jnp.dot(h1.astype(jnp.bfloat16), w2, preferred_element_type=jnp.float32) + b2
    h2 = jnp.maximum(h2, 0.0)
    h3 = jnp.sum(h2 * w3, axis=-1, keepdims=True) + b3
    return (jnp.tanh(h3) * max_action)[:, :action_dim]


def actor_reference_f32(x, params, max_action=MAX_ACTION, action_dim=ACTION_DIM):
    """Pure float32 reference (same stored weight values, no bf16 operand casts)."""
    w1, b1, w2, b2, w3, b3 = params
    h1 = jnp.maximum(x @ w1 + b1, 0.0)
    h2 = jnp.maximum(h1 @ w2.astype(jnp.float32) + b2, 0.0)
    h3 = jnp.sum(h2 * w3, axis=-1, keepdims=True) + b3
    return (jnp.tanh(h3) * max_action)[:, :action_dim]


if __name__ == "__main__":
    key = jax.random.PRNGKey(0)
    pkey, xkey = jax.random.split(key)

    params = init_params(pkey)
    batch = 8
    x = jax.random.normal(xkey, (batch, STATE_DIM), jnp.float32)

    out = jax.block_until_ready(actor_forward(x, params))

    ref = actor_reference_mirrored(x, params)
    ref_f32 = actor_reference_f32(x, params)

    assert out.shape == (batch, ACTION_DIM), out.shape
    assert jnp.allclose(out, ref, atol=1e-3, rtol=1e-3), (out, ref)
    assert jnp.allclose(out, ref_f32, atol=5e-2, rtol=5e-2), (out, ref_f32)
    assert bool(jnp.all(jnp.abs(out) <= MAX_ACTION + 1e-5))

    print("KERNEL_OK")
</pallas_src>

<mosaic_0001>
module attributes {stable_mosaic.version = 11 : i64} {
  func.func @actor_kernel(%arg0: i32, %arg1: memref<8x3xf32, #tpu.memory_space<vmem>>, %arg2: memref<3x512xf32, #tpu.memory_space<vmem>>, %arg3: memref<1x512xf32, #tpu.memory_space<vmem>>, %arg4: memref<512x384xbf16, #tpu.memory_space<vmem>>, %arg5: memref<1x384xf32, #tpu.memory_space<vmem>>, %arg6: memref<1x384xf32, #tpu.memory_space<vmem>>, %arg7: memref<1x1xf32, #tpu.memory_space<vmem>>, %arg8: memref<8x128xf32, #tpu.memory_space<vmem>>) attributes {dimension_semantics = [#tpu.dimension_semantics<parallel>], iteration_bounds = array<i64: 1>, scalar_prefetch = 0 : i64, scratch_operands = 0 : i64, tpu.core_type = #tpu.core_type<tc>, window_params = [{transform_indices = @transform_0, window_bounds = array<i64: 8, 3>}, {pipeline_mode = #tpu.pipeline_mode<synchronous>, transform_indices = @transform_1, window_bounds = array<i64: 3, 512>}, {pipeline_mode = #tpu.pipeline_mode<synchronous>, transform_indices = @transform_2, window_bounds = array<i64: 1, 512>}, {pipeline_mode = #tpu.pipeline_mode<synchronous>, transform_indices = @transform_3, window_bounds = array<i64: 512, 384>}, {pipeline_mode = #tpu.pipeline_mode<synchronous>, transform_indices = @transform_4, window_bounds = array<i64: 1, 384>}, {pipeline_mode = #tpu.pipeline_mode<synchronous>, transform_indices = @transform_5, window_bounds = array<i64: 1, 384>}, {pipeline_mode = #tpu.pipeline_mode<synchronous>, transform_indices = @transform_6, window_bounds = array<i64: 1, 1>}, {transform_indices = @transform_7, window_bounds = array<i64: 8, 128>}]} {
    %c0 = arith.constant 0 : index
    %c0_0 = arith.constant 0 : index
    %0 = vector.load %arg1[%c0, %c0_0] : memref<8x3xf32, #tpu.memory_space<vmem>>, vector<8x3xf32>
    %c0_1 = arith.constant 0 : index
    %c0_2 = arith.constant 0 : index
    %1 = vector.load %arg2[%c0_1, %c0_2] : memref<3x512xf32, #tpu.memory_space<vmem>>, vector<3x512xf32>
    %2 = vector.extract_strided_slice %0 {offsets = [0, 0], sizes = [8, 1], strides = [1, 1]} : vector<8x3xf32> to vector<8x1xf32>
    %3 = vector.extract_strided_slice %1 {offsets = [0, 0], sizes = [1, 512], strides = [1, 1]} : vector<3x512xf32> to vector<1x512xf32>
    %4 = vector.broadcast %2 : vector<8x1xf32> to vector<8x512xf32>
    %5 = vector.broadcast %3 : vector<1x512xf32> to vector<8x512xf32>
    %6 = arith.mulf %4, %5 : vector<8x512xf32>
    %7 = vector.extract_strided_slice %0 {offsets = [0, 1], sizes = [8, 1], strides = [1, 1]} : vector<8x3xf32> to vector<8x1xf32>
    %8 = vector.extract_strided_slice %1 {offsets = [1, 0], sizes = [1, 512], strides = [1, 1]} : vector<3x512xf32> to vector<1x512xf32>
    %9 = vector.broadcast %7 : vector<8x1xf32> to vector<8x512xf32>
    %10 = vector.broadcast %8 : vector<1x512xf32> to vector<8x512xf32>
    %11 = arith.mulf %9, %10 : vector<8x512xf32>
    %12 = arith.addf %6, %11 : vector<8x512xf32>
    %13 = vector.extract_strided_slice %0 {offsets = [0, 2], sizes = [8, 1], strides = [1, 1]} : vector<8x3xf32> to vector<8x1xf32>
    %14 = vector.extract_strided_slice %1 {offsets = [2, 0], sizes = [1, 512], strides = [1, 1]} : vector<3x512xf32> to vector<1x512xf32>
    %15 = vector.broadcast %13 : vector<8x1xf32> to vector<8x512xf32>
    %16 = vector.broadcast %14 : vector<1x512xf32> to vector<8x512xf32>
    %17 = arith.mulf %15, %16 : vector<8x512xf32>
    %18 = arith.addf %12, %17 : vector<8x512xf32>
    %c0_3 = arith.constant 0 : index
    %c0_4 = arith.constant 0 : index
    %19 = vector.load %arg3[%c0_3, %c0_4] : memref<1x512xf32, #tpu.memory_space<vmem>>, vector<1x512xf32>
    %20 = vector.broadcast %19 : vector<1x512xf32> to vector<8x512xf32>
    %21 = arith.addf %18, %20 : vector<8x512xf32>
    %cst = arith.constant 0.000000e+00 : f32
    %22 = vector.broadcast %cst : f32 to vector<8x512xf32>
    %23 = arith.maximumf %21, %22 : vector<8x512xf32>
    %24 = arith.truncf %23 : vector<8x512xf32> to vector<8x512xbf16>
    %c0_5 = arith.constant 0 : index
    %c0_6 = arith.constant 0 : index
    %25 = vector.load %arg4[%c0_5, %c0_6] : memref<512x384xbf16, #tpu.memory_space<vmem>>, vector<512x384xbf16>
    %cst_7 = arith.constant dense<0.000000e+00> : vector<8x384xf32>
    %26 = tpu.matmul %24, %25, %cst_7 {dimension_numbers = #tpu.dot_dimension_numbers<[1], [0], [0], [1], [0, 0, 1, 1], [], []>} : vector<8x512xbf16>, vector<512x384xbf16>, vector<8x384xf32> -> vector<8x384xf32>
    %c0_8 = arith.constant 0 : index
    %c0_9 = arith.constant 0 : index
    %27 = vector.load %arg5[%c0_8, %c0_9] : memref<1x384xf32, #tpu.memory_space<vmem>>, vector<1x384xf32>
    %28 = vector.broadcast %27 : vector<1x384xf32> to vector<8x384xf32>
    %29 = arith.addf %26, %28 : vector<8x384xf32>
    %cst_10 = arith.constant 0.000000e+00 : f32
    %30 = vector.broadcast %cst_10 : f32 to vector<8x384xf32>
    %31 = arith.maximumf %29, %30 : vector<8x384xf32>
    %c0_11 = arith.constant 0 : index
    %c0_12 = arith.constant 0 : index
    %32 = vector.load %arg6[%c0_11, %c0_12] : memref<1x384xf32, #tpu.memory_space<vmem>>, vector<1x384xf32>
    %33 = vector.broadcast %32 : vector<1x384xf32> to vector<8x384xf32>
    %34 = arith.mulf %31, %33 : vector<8x384xf32>
    %cst_13 = arith.constant dense<0.000000e+00> : vector<8xf32>
    %35 = vector.multi_reduction <add>, %34, %cst_13 [1] : vector<8x384xf32> to vector<8xf32>
    %36 = vector.shape_cast %35 : vector<8xf32> to vector<8x1xf32>
    %c0_14 = arith.constant 0 : index
    %c0_15 = arith.constant 0 : index
    %37 = vector.load %arg7[%c0_14, %c0_15] : memref<1x1xf32, #tpu.memory_space<vmem>>, vector<1x1xf32>
    %38 = vector.broadcast %37 : vector<1x1xf32> to vector<8x1xf32>
    %39 = arith.addf %36, %38 : vector<8x1xf32>
    %40 = math.tanh %39 : vector<8x1xf32>
    %cst_16 = arith.constant 2.000000e+00 : f32
    %41 = vector.broadcast %cst_16 : f32 to vector<8x1xf32>
    %42 = arith.mulf %40, %41 : vector<8x1xf32>
    %43 = vector.shape_cast %42 : vector<8x1xf32> to vector<8x1xf32>
    %44 = vector.broadcast %43 : vector<8x1xf32> to vector<8x128xf32>
    %c0_17 = arith.constant 0 : index
    %c0_18 = arith.constant 0 : index
    %45 = vector.load %arg8[%c0_17, %c0_18] : memref<8x128xf32, #tpu.memory_space<vmem>>, vector<8x128xf32>
    tpu.vector_store %arg8[%c0_17, %c0_18], %44 {strides = array<i32>} : memref<8x128xf32, #tpu.memory_space<vmem>>, vector<8x128xf32>,
    return
  }
  func.func @transform_0(%arg0: i32) -> (i32, i32) {
    %c0_i32 = arith.constant 0 : i32
    %c0_i32_0 = arith.constant 0 : i32
    return %arg0, %c0_i32 : i32, i32
  }
  func.func @transform_1(%arg0: i32) -> (i32, i32) {
    %c0_i32 = arith.constant 0 : i32
    %c0_i32_0 = arith.constant 0 : i32
    %c0_i32_1 = arith.constant 0 : i32
    return %c0_i32, %c0_i32_0 : i32, i32
  }
  func.func @transform_2(%arg0: i32) -> (i32, i32) {
    %c0_i32 = arith.constant 0 : i32
    %c0_i32_0 = arith.constant 0 : i32
    %c0_i32_1 = arith.constant 0 : i32
    return %c0_i32, %c0_i32_0 : i32, i32
  }
  func.func @transform_3(%arg0: i32) -> (i32, i32) {
    %c0_i32 = arith.constant 0 : i32
    %c0_i32_0 = arith.constant 0 : i32
    %c0_i32_1 = arith.constant 0 : i32
    return %c0_i32, %c0_i32_0 : i32, i32
  }
  func.func @transform_4(%arg0: i32) -> (i32, i32) {
    %c0_i32 = arith.constant 0 : i32
    %c0_i32_0 = arith.constant 0 : i32
    %c0_i32_1 = arith.constant 0 : i32
    return %c0_i32, %c0_i32_0 : i32, i32
  }
  func.func @transform_5(%arg0: i32) -> (i32, i32) {
    %c0_i32 = arith.constant 0 : i32
    %c0_i32_0 = arith.constant 0 : i32
    %c0_i32_1 = arith.constant 0 : i32
    return %c0_i32, %c0_i32_0 : i32, i32
  }
  func.func @transform_6(%arg0: i32) -> (i32, i32) {
    %c0_i32 = arith.constant 0 : i32
    %c0_i32_0 = arith.constant 0 : i32
    %c0_i32_1 = arith.constant 0 : i32
    return %c0_i32, %c0_i32_0 : i32, i32
  }
  func.func @transform_7(%arg0: i32) -> (i32, i32) {
    %c0_i32 = arith.constant 0 : i32
    %c0_i32_0 = arith.constant 0 : i32
    return %arg0, %c0_i32 : i32, i32
  }
}

</mosaic_0001>

<llo_original>
// kernel: tpu_custom_call.1
$region0: #{tpu_custom_call.1}
  #allocation0 [shape = 'u32[]', space=smem, size = 0x4, offset = 0x4, fixed_abs, tag = 'smem constant byte address 0x4 - core index']
  #allocation1 [shape = 'u32[72,128]{1,0:T(1,128)}', space=vmem, size = 0x9000, scoped, tag = 'internal scratch']
  #allocation2 [shape = 'f32[1,1]{1,0:T(1,128)S(1)}', space=vmem, size = 0x200, scoped, tag = 'scoped memory for tpu_custom_call.1']
  %s0 = inlined_call_operand.vmem [shape: f32[8,3], index: 0, kind: input, shape index: {}]
  %s1 = inlined_call_operand.hbm [shape: f32[3,512], index: 1, kind: input, shape index: {}]
  %s2 = inlined_call_operand.vmem [shape: f32[1,512], index: 2, kind: input, shape index: {}]
  %s3 = inlined_call_operand.hbm [shape: bf16[512,384], index: 3, kind: input, shape index: {}]
  %s4 = inlined_call_operand.vmem [shape: f32[1,384], index: 4, kind: input, shape index: {}]
  %s5 = inlined_call_operand.vmem [shape: f32[1,384], index: 5, kind: input, shape index: {}]
  %s6 = inlined_call_operand.<no memory space> [shape: f32[1,1], index: 6, kind: input, shape index: {}]
  %s7 = inlined_call_operand.hbm [shape: f32[8,128], index: 7, kind: output, shape index: {}]
  %s8 = sld [smem:[#allocation0]]
  $region46: #{tpu_custom_call.1} parent=0
    _
  %s10 = ssub.s32 1, %s8
  %s11 = scalar_select 0, %s10, %s8
  %v12 = vstv %s6
  %13 = vst [vmem:[#allocation2] sm:$0x1] %v12
  $region1: #{tpu_custom_call.1} parent=0
    #allocation3 [shape = 'u8[8192]{0}', space=vmem, size = 0x2000, scoped, tag = 'input window, operand 1, single buffered']
    #allocation4 [shape = 's32[1]{0}', space=sflag, size = 0x4, scoped, tag = 'scoped memory for tpu_custom_call.1']
    #allocation5 [shape = 's32[1]{0}', space=sflag, size = 0x4, scoped, tag = 'scoped memory for tpu_custom_call.1']
    #allocation6 [shape = 'u8[393216]{0}', space=vmem, size = 0x60000, scoped, tag = 'input window, operand 3, single buffered']
    #allocation7 [shape = 's32[1]{0}', space=sflag, size = 0x4, scoped, tag = 'scoped memory for tpu_custom_call.1']
    #allocation8 [shape = 'u8[4096]{0}', space=vmem, size = 0x1000, scoped, tag = 'output window, operand 0, single buffered']
    %14 = vsyncpa [#allocation4], 0
    %15 = vsyncpa [#allocation7], 0
    %16 = vsyncpa [#allocation5], 0
    // Predicated region
    $region2: #{tpu_custom_call.1} parent=1 // pred_check
      _
    $region3: #{tpu_custom_call.1} parent=1 // pred_check_branch
      %18 = sbr.rel (0) target = $region5
    $region4: #{tpu_custom_call.1} parent=1 // pred_region
      _
    $region5: #{tpu_custom_call.1} parent=1 // pred_fallthru
      _
    // Predicated region
    $region6: #{tpu_custom_call.1} parent=1 // pred_check
      _
    $region7: #{tpu_custom_call.1} parent=1 // pred_check_branch
      %20 = sbr.rel (0) target = $region9
    $region8: #{tpu_custom_call.1} parent=1 // pred_region
      %22 = vsyncadd [#allocation4], 0
      %s24 = sshll.u32 %s1, 4
      %s25 = int_to_ptr.hbm [resolvable:$true] %s24
      %s26 = sshll.u32 [#allocation3], 4
      %s27 = int_to_ptr.vmem [resolvable:$true] %s26
      %29 = dma.hbm_to_vmem [thread:$0]  %s25, 256, %s27, [#allocation4]
    $region9: #{tpu_custom_call.1} parent=1 // pred_fallthru
      _
    // Predicated region
    $region10: #{tpu_custom_call.1} parent=1 // pred_check
      _
    $region11: #{tpu_custom_call.1} parent=1 // pred_check_branch
      %31 = sbr.rel (0) target = $region13
    $region12: #{tpu_custom_call.1} parent=1 // pred_region
      _
    $region13: #{tpu_custom_call.1} parent=1 // pred_fallthru
      _
    // Predicated region
    $region14: #{tpu_custom_call.1} parent=1 // pred_check
      _
    $region15: #{tpu_custom_call.1} parent=1 // pred_check_branch
      %33 = sbr.rel (0) target = $region17
    $region16: #{tpu_custom_call.1} parent=1 // pred_region
      %35 = vsyncadd [#allocation7], 0
      %s36 = sshll.u32 %s3, 4
      %s37 = int_to_ptr.hbm [resolvable:$true] %s36
      %s38 = sshll.u32 [#allocation6], 4
      %s39 = int_to_ptr.vmem [resolvable:$true] %s38
      %44 = dma.hbm_to_vmem [thread:$0]  %s37, 12288, %s39, [#allocation7], 192, 192, 12
    $region17: #{tpu_custom_call.1} parent=1 // pred_fallthru
      _
    // Predicated region
    $region18: #{tpu_custom_call.1} parent=1 // pred_check
      _
    $region19: #{tpu_custom_call.1} parent=1 // pred_check_branch
      %46 = sbr.rel (0) target = $region21
    $region20: #{tpu_custom_call.1} parent=1 // pred_region
      _
    $region21: #{tpu_custom_call.1} parent=1 // pred_fallthru
      _
    // Predicated region
    $region22: #{tpu_custom_call.1} parent=1 // pred_check
      _
    $region23: #{tpu_custom_call.1} parent=1 // pred_check_branch
      %48 = sbr.rel (0) target = $region25
    $region24: #{tpu_custom_call.1} parent=1 // pred_region
      _
    $region25: #{tpu_custom_call.1} parent=1 // pred_fallthru
      _
    // Predicated region
    $region26: #{tpu_custom_call.1} parent=1 // pred_check
      _
    $region27: #{tpu_custom_call.1} parent=1 // pred_check_branch
      %50 = sbr.rel (0) target = $region29
    $region28: #{tpu_custom_call.1} parent=1 // pred_region
      _
    $region29: #{tpu_custom_call.1} parent=1 // pred_fallthru
      _
    // Predicated region
    $region30: #{tpu_custom_call.1} parent=1 // pred_check
      _
    $region31: #{tpu_custom_call.1} parent=1 // pred_check_branch
      %52 = sbr.rel (0) target = $region33
    $region32: #{tpu_custom_call.1} parent=1 // pred_region
      %54 = dma.done [#allocation4], 256
    $region33: #{tpu_custom_call.1} parent=1 // pred_fallthru
      _
    // Predicated region
    $region34: #{tpu_custom_call.1} parent=1 // pred_check
      _
    $region35: #{tpu_custom_call.1} parent=1 // pred_check_branch
      %56 = sbr.rel (0) target = $region37
    $region36: #{tpu_custom_call.1} parent=1 // pred_region
      %58 = dma.done [#allocation7], 12288
    $region37: #{tpu_custom_call.1} parent=1 // pred_fallthru
      _
    %v59 = vld [vmem:[%s0] sm:$0xff]
    %v60 = vld [vmem:[#allocation3] sm:$0x77]
    %v61 = vld [vmem:[#allocation3 + $0x8] sm:$0x77]
    %63 = vset.pattern.permute.xlu0 0
    %64 = vperm.xlu0 %63, %v59
    %v65 = vpop.permute.xlu0 %64
    %v69 = vperm.slane %v60, 0
    %v70 = vperm.slane %v60, 4
    %v71 = vperm.slane %v61, 0
    %v72 = vperm.slane %v61, 4
    %v77 = vperm.slane %v69, 0
    %v78 = vperm.slane %v70, 0
    %v79 = vperm.slane %v71, 0
    %v80 = vperm.slane %v72, 0
    %v81 = vmul.f32 %v65, %v77
    %v82 = vmul.f32 %v65, %v78
    %v83 = vmul.f32 %v65, %v79
    %v84 = vmul.f32 %v65, %v80
    %85 = vset.pattern.permute.xlu0 1
    %86 = vperm.xlu0 %85, %v59
    %v87 = vpop.permute.xlu0 %86
    %v89 = vperm.slane %v60, 1
    %v90 = vperm.slane %v60, 5
    %v91 = vperm.slane %v61, 1
    %v92 = vperm.slane %v61, 5
    %v97 = vperm.slane %v89, 1
    %v98 = vperm.slane %v90, 1
    %v99 = vperm.slane %v91, 1
    %v100 = vperm.slane %v92, 1
    %v101 = vmul.f32 %v87, %v97
    %v102 = vmul.f32 %v87, %v98
    %v103 = vmul.f32 %v87, %v99
    %v104 = vmul.f32 %v87, %v100
    %v105 = vadd.f32 %v81, %v101
    %v106 = vadd.f32 %v82, %v102
    %v107 = vadd.f32 %v83, %v103
    %v108 = vadd.f32 %v84, %v104
    %109 = vset.pattern.permute.xlu0 2
    %110 = vperm.xlu0 %109, %v59
    %v111 = vpop.permute.xlu0 %110
    %v113 = vperm.slane %v60, 2
    %v114 = vperm.slane %v60, 6
    %v115 = vperm.slane %v61, 2
    %v116 = vperm.slane %v61, 6
    %v121 = vperm.slane %v113, 2
    %v122 = vperm.slane %v114, 2
    %v123 = vperm.slane %v115, 2
    %v124 = vperm.slane %v116, 2
    %v125 = vmul.f32 %v111, %v121
    %v126 = vmul.f32 %v111, %v122
    %v127 = vmul.f32 %v111, %v123
    %v128 = vmul.f32 %v111, %v124
    %v129 = vadd.f32 %v105, %v125
    %v130 = vadd.f32 %v106, %v126
    %v131 = vadd.f32 %v107, %v127
    %v132 = vadd.f32 %v108, %v128
    %v133 = vld [vmem:[%s2] sm:$0xf]
    %v135 = vperm.slane %v133, 0
    %v136 = vperm.slane %v133, 1
    %v137 = vperm.slane %v133, 2
    %v138 = vperm.slane %v133, 3
    %v143 = vadd.f32 %v129, %v135
    %v144 = vadd.f32 %v130, %v136
    %v145 = vadd.f32 %v131, %v137
    %v146 = vadd.f32 %v132, %v138
    %v147 = vmax.f32 %v143, 0.0
    %v148 = vmax.f32 %v144, 0.0
    %v149 = vmax.f32 %v145, 0.0
    %v150 = vmax.f32 %v146, 0.0
    %v151 = vpack.c.bf16 %v147, %v147
    %v152 = vpack.c.bf16 %v148, %v148
    %v153 = vpack.c.bf16 %v149, %v149
    %v154 = vpack.c.bf16 %v150, %v150
    %v155 = vld [vmem:[#allocation6] sm:$0xff]
    %v156 = vld [vmem:[#allocation6 + $0x8] sm:$0xf]
    %v157 = vld [vmem:[#allocation6 + $0xc] sm:$0xff]
    %v158 = vld [vmem:[#allocation6 + $0x14] sm:$0xf]
    %v159 = vld [vmem:[#allocation6 + $0x18] sm:$0xff]
    %v160 = vld [vmem:[#allocation6 + $0x20] sm:$0xf]
    %v161 = vld [vmem:[#allocation6 + $0x24] sm:$0xff]
    %v162 = vld [vmem:[#allocation6 + $0x2c] sm:$0xf]
    %v163 = vld [vmem:[#allocation6 + $0x30] sm:$0xff]
    %v164 = vld [vmem:[#allocation6 + $0x38] sm:$0xf]
    %v165 = vld [vmem:[#allocation6 + $0x3c] sm:$0xff]
    %v166 = vld [vmem:[#allocation6 + $0x44] sm:$0xf]
    %v167 = vld [vmem:[#allocation6 + $0x48] sm:$0xff]
    %v168 = vld [vmem:[#allocation6 + $0x50] sm:$0xf]
    %v169 = vld [vmem:[#allocation6 + $0x54] sm:$0xff]
    %v170 = vld [vmem:[#allocation6 + $0x5c] sm:$0xf]
    %v171 = vld [vmem:[#allocation6 + $0x60] sm:$0xff]
    %v172 = vld [vmem:[#allocation6 + $0x68] sm:$0xf]
    %v173 = vld [vmem:[#allocation6 + $0x6c] sm:$0xff]
    %v174 = vld [vmem:[#allocation6 + $0x74] sm:$0xf]
    %v175 = vld [vmem:[#allocation6 + $0x78] sm:$0xff]
    %v176 = vld [vmem:[#allocation6 + $0x80] sm:$0xf]
    %v177 = vld [vmem:[#allocation6 + $0x84] sm:$0xff]
    %v178 = vld [vmem:[#allocation6 + $0x8c] sm:$0xf]
    %v179 = vld [vmem:[#allocation6 + $0x90] sm:$0xff]
    %v180 = vld [vmem:[#allocation6 + $0x98] sm:$0xf]
    %v181 = vld [vmem:[#allocation6 + $0x9c] sm:$0xff]
    %v182 = vld [vmem:[#allocation6 + $0xa4] sm:$0xf]
    %v183 = vld [vmem:[#allocation6 + $0xa8] sm:$0xff]
    %v184 = vld [vmem:[#allocation6 + $0xb0] sm:$0xf]
    %v185 = vld [vmem:[#allocation6 + $0xb4] sm:$0xff]
    %v186 = vld [vmem:[#allocation6 + $0xbc] sm:$0xf]
    %v187 = vld [vmem:[#allocation6 + $0xc0] sm:$0xff]
    %v188 = vld [vmem:[#allocation6 + $0xc8] sm:$0xf]
    %v189 = vld [vmem:[#allocation6 + $0xcc] sm:$0xff]
    %v190 = vld [vmem:[#allocation6 + $0xd4] sm:$0xf]
    %v191 = vld [vmem:[#allocation6 + $0xd8] sm:$0xff]
    %v192 = vld [vmem:[#allocation6 + $0xe0] sm:$0xf]
    %v193 = vld [vmem:[#allocation6 + $0xe4] sm:$0xff]
    %v194 = vld [vmem:[#allocation6 + $0xec] sm:$0xf]
    %v195 = vld [vmem:[#allocation6 + $0xf0] sm:$0xff]
    %v196 = vld [vmem:[#allocation6 + $0xf8] sm:$0xf]
    %v197 = vld [vmem:[#allocation6 + $0xfc] sm:$0xff]
    %v198 = vld [vmem:[#allocation6 + $0x104] sm:$0xf]
    %v199 = vld [vmem:[#allocation6 + $0x108] sm:$0xff]
    %v200 = vld [vmem:[#allocation6 + $0x110] sm:$0xf]
    %v201 = vld [vmem:[#allocation6 + $0x114] sm:$0xff]
    %v202 = vld [vmem:[#allocation6 + $0x11c] sm:$0xf]
    %v203 = vld [vmem:[#allocation6 + $0x120] sm:$0xff]
    %v204 = vld [vmem:[#allocation6 + $0x128] sm:$0xf]
    %v205 = vld [vmem:[#allocation6 + $0x12c] sm:$0xff]
    %v206 = vld [vmem:[#allocation6 + $0x134] sm:$0xf]
    %v207 = vld [vmem:[#allocation6 + $0x138] sm:$0xff]
    %v208 = vld [vmem:[#allocation6 + $0x140] sm:$0xf]
    %v209 = vld [vmem:[#allocation6 + $0x144] sm:$0xff]
    %v210 = vld [vmem:[#allocation6 + $0x14c] sm:$0xf]
    %v211 = vld [vmem:[#allocation6 + $0x150] sm:$0xff]
    %v212 = vld [vmem:[#allocation6 + $0x158] sm:$0xf]
    %v213 = vld [vmem:[#allocation6 + $0x15c] sm:$0xff]
    %v214 = vld [vmem:[#allocation6 + $0x164] sm:$0xf]
    %v215 = vld [vmem:[#allocation6 + $0x168] sm:$0xff]
    %v216 = vld [vmem:[#allocation6 + $0x170] sm:$0xf]
    %v217 = vld [vmem:[#allocation6 + $0x174] sm:$0xff]
    %v218 = vld [vmem:[#allocation6 + $0x17c] sm:$0xf]
    %v219 = vld [vmem:[#allocation6 + $0x180] sm:$0xff]
    %v220 = vld [vmem:[#allocation6 + $0x188] sm:$0xf]
    %v221 = vld [vmem:[#allocation6 + $0x18c] sm:$0xff]
    %v222 = vld [vmem:[#allocation6 + $0x194] sm:$0xf]
    %v223 = vld [vmem:[#allocation6 + $0x198] sm:$0xff]
    %v224 = vld [vmem:[#allocation6 + $0x1a0] sm:$0xf]
    %v225 = vld [vmem:[#allocation6 + $0x1a4] sm:$0xff]
    %v226 = vld [vmem:[#allocation6 + $0x1ac] sm:$0xf]
    %v227 = vld [vmem:[#allocation6 + $0x1b0] sm:$0xff]
    %v228 = vld [vmem:[#allocation6 + $0x1b8] sm:$0xf]
    %v229 = vld [vmem:[#allocation6 + $0x1bc] sm:$0xff]
    %v230 = vld [vmem:[#allocation6 + $0x1c4] sm:$0xf]
    %v231 = vld [vmem:[#allocation6 + $0x1c8] sm:$0xff]
    %v232 = vld [vmem:[#allocation6 + $0x1d0] sm:$0xf]
    %v233 = vld [vmem:[#allocation6 + $0x1d4] sm:$0xff]
    %v234 = vld [vmem:[#allocation6 + $0x1dc] sm:$0xf]
    %v235 = vld [vmem:[#allocation6 + $0x1e0] sm:$0xff]
    %v236 = vld [vmem:[#allocation6 + $0x1e8] sm:$0xf]
    %v237 = vld [vmem:[#allocation6 + $0x1ec] sm:$0xff]
    %v238 = vld [vmem:[#allocation6 + $0x1f4] sm:$0xf]
    %v239 = vld [vmem:[#allocation6 + $0x1f8] sm:$0xff]
    %v240 = vld [vmem:[#allocation6 + $0x200] sm:$0xf]
    %v241 = vld [vmem:[#allocation6 + $0x204] sm:$0xff]
    %v242 = vld [vmem:[#allocation6 + $0x20c] sm:$0xf]
    %v243 = vld [vmem:[#allocation6 + $0x210] sm:$0xff]
    %v244 = vld [vmem:[#allocation6 + $0x218] sm:$0xf]
    %v245 = vld [vmem:[#allocation6 + $0x21c] sm:$0xff]
    %v246 = vld [vmem:[#allocation6 + $0x224] sm:$0xf]
    %v247 = vld [vmem:[#allocation6 + $0x228] sm:$0xff]
    %v248 = vld [vmem:[#allocation6 + $0x230] sm:$0xf]
    %v249 = vld [vmem:[#allocation6 + $0x234] sm:$0xff]
    %v250 = vld [vmem:[#allocation6 + $0x23c] sm:$0xf]
    %v251 = vld [vmem:[#allocation6 + $0x240] sm:$0xff]
    %v252 = vld [vmem:[#allocation6 + $0x248] sm:$0xf]
    %v253 = vld [vmem:[#allocation6 + $0x24c] sm:$0xff]
    %v254 = vld [vmem:[#allocation6 + $0x254] sm:$0xf]
    %v255 = vld [vmem:[#allocation6 + $0x258] sm:$0xff]
    %v256 = vld [vmem:[#allocation6 + $0x260] sm:$0xf]
    %v257 = vld [vmem:[#allocation6 + $0x264] sm:$0xff]
    %v258 = vld [vmem:[#allocation6 + $0x26c] sm:$0xf]
    %v259 = vld [vmem:[#allocation6 + $0x270] sm:$0xff]
    %v260 = vld [vmem:[#allocation6 + $0x278] sm:$0xf]
    %v261 = vld [vmem:[#allocation6 + $0x27c] sm:$0xff]
    %v262 = vld [vmem:[#allocation6 + $0x284] sm:$0xf]
    %v263 = vld [vmem:[#allocation6 + $0x288] sm:$0xff]
    %v264 = vld [vmem:[#allocation6 + $0x290] sm:$0xf]
    %v265 = vld [vmem:[#allocation6 + $0x294] sm:$0xff]
    %v266 = vld [vmem:[#allocation6 + $0x29c] sm:$0xf]
    %v267 = vld [vmem:[#allocation6 + $0x2a0] sm:$0xff]
    %v268 = vld [vmem:[#allocation6 + $0x2a8] sm:$0xf]
    %v269 = vld [vmem:[#allocation6 + $0x2ac] sm:$0xff]
    %v270 = vld [vmem:[#allocation6 + $0x2b4] sm:$0xf]
    %v271 = vld [vmem:[#allocation6 + $0x2b8] sm:$0xff]
    %v272 = vld [vmem:[#allocation6 + $0x2c0] sm:$0xf]
    %v273 = vld [vmem:[#allocation6 + $0x2c4] sm:$0xff]
    %v274 = vld [vmem:[#allocation6 + $0x2cc] sm:$0xf]
    %v275 = vld [vmem:[#allocation6 + $0x2d0] sm:$0xff]
    %v276 = vld [vmem:[#allocation6 + $0x2d8] sm:$0xf]
    %v277 = vld [vmem:[#allocation6 + $0x2dc] sm:$0xff]
    %v278 = vld [vmem:[#allocation6 + $0x2e4] sm:$0xf]
    %v279 = vld [vmem:[#allocation6 + $0x2e8] sm:$0xff]
    %v280 = vld [vmem:[#allocation6 + $0x2f0] sm:$0xf]
    %v281 = vld [vmem:[#allocation6 + $0x2f4] sm:$0xff]
    %v282 = vld [vmem:[#allocation6 + $0x2fc] sm:$0xf]
    %v283 = vld [vmem:[%s4] sm:$0x7]
    %v285 = vperm.slane %v283, 0
    %v286 = vperm.slane %v283, 1
    %v287 = vperm.slane %v283, 2
    %v419 = vunpack.c.l.b16 %v155
    %v420 = vunpack.c.h.b16 %v155
    %v421 = vunpack.c.l.b16 %v156
    %v422 = vunpack.c.l.b16 %v157
    %v423 = vunpack.c.h.b16 %v157
    %v424 = vunpack.c.l.b16 %v158
    %v425 = vunpack.c.l.b16 %v159
    %v426 = vunpack.c.h.b16 %v159
    %v427 = vunpack.c.l.b16 %v160
    %v428 = vunpack.c.l.b16 %v161
    %v429 = vunpack.c.h.b16 %v161
    %v430 = vunpack.c.l.b16 %v162
    %v431 = vunpack.c.l.b16 %v163
    %v432 = vunpack.c.h.b16 %v163
    %v433 = vunpack.c.l.b16 %v164
    %v434 = vunpack.c.l.b16 %v165
    %v435 = vunpack.c.h.b16 %v165
    %v436 = vunpack.c.l.b16 %v166
    %v437 = vunpack.c.l.b16 %v167
    %v438 = vunpack.c.h.b16 %v167
    %v439 = vunpack.c.l.b16 %v168
    %v440 = vunpack.c.l.b16 %v169
    %v441 = vunpack.c.h.b16 %v169
    %v442 = vunpack.c.l.b16 %v170
    %v443 = vunpack.c.l.b16 %v171
    %v444 = vunpack.c.h.b16 %v171
    %v445 = vunpack.c.l.b16 %v172
    %v446 = vunpack.c.l.b16 %v173
    %v447 = vunpack.c.h.b16 %v173
    %v448 = vunpack.c.l.b16 %v174
    %v449 = vunpack.c.l.b16 %v175
    %v450 = vunpack.c.h.b16 %v175
    %v451 = vunpack.c.l.b16 %v176
    %v452 = vunpack.c.l.b16 %v177
    %v453 = vunpack.c.h.b16 %v177
    %v454 = vunpack.c.l.b16 %v178
    %v455 = vunpack.c.l.b16 %v179
    %v456 = vunpack.c.h.b16 %v179
    %v457 = vunpack.c.l.b16 %v180
    %v458 = vunpack.c.l.b16 %v181
    %v459 = vunpack.c.h.b16 %v181
    %v460 = vunpack.c.l.b16 %v182
    %v461 = vunpack.c.l.b16 %v183
    %v462 = vunpack.c.h.b16 %v183
    %v463 = vunpack.c.l.b16 %v184
    %v464 = vunpack.c.l.b16 %v185
    %v465 = vunpack.c.h.b16 %v185
    %v466 = vunpack.c.l.b16 %v186
    %v467 = vunpack.c.l.b16 %v187
    %v468 = vunpack.c.h.b16 %v187
    %v469 = vunpack.c.l.b16 %v188
    %v470 = vunpack.c.l.b16 %v189
    %v471 = vunpack.c.h.b16 %v189
    %v472 = vunpack.c.l.b16 %v190
    %v473 = vunpack.c.l.b16 %v191
    %v474 = vunpack.c.h.b16 %v191
    %v475 = vunpack.c.l.b16 %v192
    %v476 = vunpack.c.l.b16 %v193
    %v477 = vunpack.c.h.b16 %v193
    %v478 = vunpack.c.l.b16 %v194
    %v479 = vunpack.c.l.b16 %v195
    %v480 = vunpack.c.h.b16 %v195
    %v481 = vunpack.c.l.b16 %v196
    %v482 = vunpack.c.l.b16 %v197
    %v483 = vunpack.c.h.b16 %v197
    %v484 = vunpack.c.l.b16 %v198
    %v485 = vunpack.c.l.b16 %v199
    %v486 = vunpack.c.h.b16 %v199
    %v487 = vunpack.c.l.b16 %v200
    %v488 = vunpack.c.l.b16 %v201
    %v489 = vunpack.c.h.b16 %v201
    %v490 = vunpack.c.l.b16 %v202
    %v491 = vunpack.c.l.b16 %v203
    %v492 = vunpack.c.h.b16 %v203
    %v493 = vunpack.c.l.b16 %v204
    %v494 = vunpack.c.l.b16 %v205
    %v495 = vunpack.c.h.b16 %v205
    %v496 = vunpack.c.l.b16 %v206
    %v497 = vunpack.c.l.b16 %v207
    %v498 = vunpack.c.h.b16 %v207
    %v499 = vunpack.c.l.b16 %v208
    %v500 = vunpack.c.l.b16 %v209
    %v501 = vunpack.c.h.b16 %v209
    %v502 = vunpack.c.l.b16 %v210
    %v503 = vunpack.c.l.b16 %v211
    %v504 = vunpack.c.h.b16 %v211
    %v505 = vunpack.c.l.b16 %v212
    %v506 = vunpack.c.l.b16 %v213
    %v507 = vunpack.c.h.b16 %v213
    %v508 = vunpack.c.l.b16 %v214
    %v509 = vunpack.c.l.b16 %v215
    %v510 = vunpack.c.h.b16 %v215
    %v511 = vunpack.c.l.b16 %v216
    %v512 = vunpack.c.l.b16 %v217
    %v513 = vunpack.c.h.b16 %v217
    %v514 = vunpack.c.l.b16 %v218
    %v515 = vunpack.c.l.b16 %v219
    %v516 = vunpack.c.h.b16 %v219
    %v517 = vunpack.c.l.b16 %v220
    %v518 = vunpack.c.l.b16 %v221
    %v519 = vunpack.c.h.b16 %v221
    %v520 = vunpack.c.l.b16 %v222
    %v521 = vunpack.c.l.b16 %v223
    %v522 = vunpack.c.h.b16 %v223
    %v523 = vunpack.c.l.b16 %v224
    %v524 = vunpack.c.l.b16 %v225
    %v525 = vunpack.c.h.b16 %v225
    %v526 = vunpack.c.l.b16 %v226
    %v527 = vunpack.c.l.b16 %v227
    %v528 = vunpack.c.h.b16 %v227
    %v529 = vunpack.c.l.b16 %v228
    %v530 = vunpack.c.l.b16 %v229
    %v531 = vunpack.c.h.b16 %v229
    %v532 = vunpack.c.l.b16 %v230
    %v533 = vunpack.c.l.b16 %v231
    %v534 = vunpack.c.h.b16 %v231
    %v535 = vunpack.c.l.b16 %v232
    %v536 = vunpack.c.l.b16 %v233
    %v537 = vunpack.c.h.b16 %v233
    %v538 = vunpack.c.l.b16 %v234
    %v539 = vunpack.c.l.b16 %v235
    %v540 = vunpack.c.h.b16 %v235
    %v541 = vunpack.c.l.b16 %v236
    %v542 = vunpack.c.l.b16 %v237
    %v543 = vunpack.c.h.b16 %v237
    %v544 = vunpack.c.l.b16 %v238
    %v545 = vunpack.c.l.b16 %v239
    %v546 = vunpack.c.h.b16 %v239
    %v547 = vunpack.c.l.b16 %v240
    %v548 = vunpack.c.l.b16 %v241
    %v549 = vunpack.c.h.b16 %v241
    %v550 = vunpack.c.l.b16 %v242
    %v551 = vunpack.c.l.b16 %v243
    %v552 = vunpack.c.h.b16 %v243
    %v553 = vunpack.c.l.b16 %v244
    %v554 = vunpack.c.l.b16 %v245
    %v555 = vunpack.c.h.b16 %v245
    %v556 = vunpack.c.l.b16 %v246
    %v557 = vunpack.c.l.b16 %v247
    %v558 = vunpack.c.h.b16 %v247
    %v559 = vunpack.c.l.b16 %v248
    %v560 = vunpack.c.l.b16 %v249
    %v561 = vunpack.c.h.b16 %v249
    %v562 = vunpack.c.l.b16 %v250
    %v563 = vunpack.c.l.b16 %v251
    %v564 = vunpack.c.h.b16 %v251
    %v565 = vunpack.c.l.b16 %v252
    %v566 = vunpack.c.l.b16 %v253
    %v567 = vunpack.c.h.b16 %v253
    %v568 = vunpack.c.l.b16 %v254
    %v569 = vunpack.c.l.b16 %v255
    %v570 = vunpack.c.h.b16 %v255
    %v571 = vunpack.c.l.b16 %v256
    %v572 = vunpack.c.l.b16 %v257
    %v573 = vunpack.c.h.b16 %v257
    %v574 = vunpack.c.l.b16 %v258
    %v575 = vunpack.c.l.b16 %v259
    %v576 = vunpack.c.h.b16 %v259
    %v577 = vunpack.c.l.b16 %v260
    %v578 = vunpack.c.l.b16 %v261
    %v579 = vunpack.c.h.b16 %v261
    %v580 = vunpack.c.l.b16 %v262
    %v581 = vunpack.c.l.b16 %v263
    %v582 = vunpack.c.h.b16 %v263
    %v583 = vunpack.c.l.b16 %v264
    %v584 = vunpack.c.l.b16 %v265
    %v585 = vunpack.c.h.b16 %v265
    %v586 = vunpack.c.l.b16 %v266
    %v587 = vunpack.c.l.b16 %v267
    %v588 = vunpack.c.h.b16 %v267
    %v589 = vunpack.c.l.b16 %v268
    %v590 = vunpack.c.l.b16 %v269
    %v591 = vunpack.c.h.b16 %v269
    %v592 = vunpack.c.l.b16 %v270
    %v593 = vunpack.c.l.b16 %v271
    %v594 = vunpack.c.h.b16 %v271
    %v595 = vunpack.c.l.b16 %v272
    %v596 = vunpack.c.l.b16 %v273
    %v597 = vunpack.c.h.b16 %v273
    %v598 = vunpack.c.l.b16 %v274
    %v599 = vunpack.c.l.b16 %v275
    %v600 = vunpack.c.h.b16 %v275
    %v601 = vunpack.c.l.b16 %v276
    %v602 = vunpack.c.l.b16 %v277
    %v603 = vunpack.c.h.b16 %v277
    %v604 = vunpack.c.l.b16 %v278
    %v605 = vunpack.c.l.b16 %v279
    %v606 = vunpack.c.h.b16 %v279
    %v607 = vunpack.c.l.b16 %v280
    %v608 = vunpack.c.l.b16 %v281
    %v609 = vunpack.c.h.b16 %v281
    %v610 = vunpack.c.l.b16 %v282
    %v611 = vpack.c.b16 %v422, %v419
    %v612 = vpack.c.b16 %v423, %v420
    %v613 = vpack.c.b16 %v424, %v421
    %v614 = vpack.c.b16 %v428, %v425
    %v615 = vpack.c.b16 %v429, %v426
    %v616 = vpack.c.b16 %v430, %v427
    %v617 = vpack.c.b16 %v434, %v431
    %v618 = vpack.c.b16 %v435, %v432
    %v619 = vpack.c.b16 %v436, %v433
    %v620 = vpack.c.b16 %v440, %v437
    %v621 = vpack.c.b16 %v441, %v438
    %v622 = vpack.c.b16 %v442, %v439
    %v623 = vpack.c.b16 %v446, %v443
    %v624 = vpack.c.b16 %v447, %v444
    %v625 = vpack.c.b16 %v448, %v445
    %v626 = vpack.c.b16 %v452, %v449
    %v627 = vpack.c.b16 %v453, %v450
    %v628 = vpack.c.b16 %v454, %v451
    %v629 = vpack.c.b16 %v458, %v455
    %v630 = vpack.c.b16 %v459, %v456
    %v631 = vpack.c.b16 %v460, %v457
    %v632 = vpack.c.b16 %v464, %v461
    %v633 = vpack.c.b16 %v465, %v462
    %v634 = vpack.c.b16 %v466, %v463
    %v635 = vpack.c.b16 %v470, %v467
    %v636 = vpack.c.b16 %v471, %v468
    %v637 = vpack.c.b16 %v472, %v469
    %v638 = vpack.c.b16 %v476, %v473
    %v639 = vpack.c.b16 %v477, %v474
    %v640 = vpack.c.b16 %v478, %v475
    %v641 = vpack.c.b16 %v482, %v479
    %v642 = vpack.c.b16 %v483, %v480
    %v643 = vpack.c.b16 %v484, %v481
    %v644 = vpack.c.b16 %v488, %v485
    %v645 = vpack.c.b16 %v489, %v486
    %v646 = vpack.c.b16 %v490, %v487
    %v647 = vpack.c.b16 %v494, %v491
    %v648 = vpack.c.b16 %v495, %v492
    %v649 = vpack.c.b16 %v496, %v493
    %v650 = vpack.c.b16 %v500, %v497
    %v651 = vpack.c.b16 %v501, %v498
    %v652 = vpack.c.b16 %v502, %v499
    %v653 = vpack.c.b16 %v506, %v503
    %v654 = vpack.c.b16 %v507, %v504
    %v655 = vpack.c.b16 %v508, %v505
    %v656 = vpack.c.b16 %v512, %v509
    %v657 = vpack.c.b16 %v513, %v510
    %v658 = vpack.c.b16 %v514, %v511
    %v659 = vpack.c.b16 %v518, %v515
    %v660 = vpack.c.b16 %v519, %v516
    %v661 = vpack.c.b16 %v520, %v517
    %v662 = vpack.c.b16 %v524, %v521
    %v663 = vpack.c.b16 %v525, %v522
    %v664 = vpack.c.b16 %v526, %v523
    %v665 = vpack.c.b16 %v530, %v527
    %v666 = vpack.c.b16 %v531, %v528
    %v667 = vpack.c.b16 %v532, %v529
    %v668 = vpack.c.b16 %v536, %v533
    %v669 = vpack.c.b16 %v537, %v534
    %v670 = vpack.c.b16 %v538, %v535
    %v671 = vpack.c.b16 %v542, %v539
    %v672 = vpack.c.b16 %v543, %v540
    %v673 = vpack.c.b16 %v544, %v541
    %v674 = vpack.c.b16 %v548, %v545
    %v675 = vpack.c.b16 %v549, %v546
    %v676 = vpack.c.b16 %v550, %v547
    %v677 = vpack.c.b16 %v554, %v551
    %v678 = vpack.c.b16 %v555, %v552
    %v679 = vpack.c.b16 %v556, %v553
    %v680 = vpack.c.b16 %v560, %v557
    %v681 = vpack.c.b16 %v561, %v558
    %v682 = vpack.c.b16 %v562, %v559
    %v683 = vpack.c.b16 %v566, %v563
    %v684 = vpack.c.b16 %v567, %v564
    %v685 = vpack.c.b16 %v568, %v565
    %v686 = vpack.c.b16 %v572, %v569
    %v687 = vpack.c.b16 %v573, %v570
    %v688 = vpack.c.b16 %v574, %v571
    %v689 = vpack.c.b16 %v578, %v575
    %v690 = vpack.c.b16 %v579, %v576
    %v691 = vpack.c.b16 %v580, %v577
    %v692 = vpack.c.b16 %v584, %v581
    %v693 = vpack.c.b16 %v585, %v582
    %v694 = vpack.c.b16 %v586, %v583
    %v695 = vpack.c.b16 %v590, %v587
    %v696 = vpack.c.b16 %v591, %v588
    %v697 = vpack.c.b16 %v592, %v589
    %v698 = vpack.c.b16 %v596, %v593
    %v699 = vpack.c.b16 %v597, %v594
    %v700 = vpack.c.b16 %v598, %v595
    %v701 = vpack.c.b16 %v602, %v599
    %v702 = vpack.c.b16 %v603, %v600
    %v703 = vpack.c.b16 %v604, %v601
    %v704 = vpack.c.b16 %v608, %v605
    %v705 = vpack.c.b16 %v609, %v606
    %v706 = vpack.c.b16 %v610, %v607
    %803 = vmatpush.bf16.msra.mxu0 %v632
    %804 = vmatpush.bf16.msra.mxu0 %v629
    %805 = vmatpush.bf16.msra.mxu0 %v626
    %806 = vmatpush.bf16.msra.mxu0 %v623
    %807 = vmatpush.bf16.msra.mxu0 %v620
    %808 = vmatpush.bf16.msra.mxu0 %v617
    %809 = vmatpush.bf16.msra.mxu0 %v614
    %810 = vmatpush.bf16.msra.mxu0 %v611
    %811 = vmatmul.bf16.gmra.mxu0 %v151
    %v812 = vpop.f32.mrf.mxu0
    %v813 = vadd.f32 %v285, %v812
    %v814 = vpop.f32.mrf.mxu0
    %815 = vdwg.mxu0
    %816 = vmatpush.bf16.msra.mxu0 %v656
    %817 = vmatpush.bf16.msra.mxu0 %v653
    %818 = vmatpush.bf16.msra.mxu0 %v650
    %819 = vmatpush.bf16.msra.mxu0 %v647
    %820 = vmatpush.bf16.msra.mxu0 %v644
    %821 = vmatpush.bf16.msra.mxu0 %v641
    %822 = vmatpush.bf16.msra.mxu0 %v638
    %823 = vmatpush.bf16.msra.mxu0 %v635
    %824 = vmatmul.bf16.gmra.mxu0 %v152
    %v825 = vpop.f32.mrf.mxu0
    %v826 = vadd.f32 %v813, %v825
    %v827 = vpop.f32.mrf.mxu0
    %828 = vdwg.mxu0
    %829 = vmatpush.bf16.msra.mxu0 %v680
    %830 = vmatpush.bf16.msra.mxu0 %v677
    %831 = vmatpush.bf16.msra.mxu0 %v674
    %832 = vmatpush.bf16.msra.mxu0 %v671
    %833 = vmatpush.bf16.msra.mxu0 %v668
    %834 = vmatpush.bf16.msra.mxu0 %v665
    %835 = vmatpush.bf16.msra.mxu0 %v662
    %836 = vmatpush.bf16.msra.mxu0 %v659
    %837 = vmatmul.bf16.gmra.mxu0 %v153
    %v838 = vpop.f32.mrf.mxu0
    %v839 = vadd.f32 %v826, %v838
    %v840 = vpop.f32.mrf.mxu0
    %841 = vdwg.mxu0
    %842 = vmatpush.bf16.msra.mxu0 %v704
    %843 = vmatpush.bf16.msra.mxu0 %v701
    %844 = vmatpush.bf16.msra.mxu0 %v698
    %845 = vmatpush.bf16.msra.mxu0 %v695
    %846 = vmatpush.bf16.msra.mxu0 %v692
    %847 = vmatpush.bf16.msra.mxu0 %v689
    %848 = vmatpush.bf16.msra.mxu0 %v686
    %849 = vmatpush.bf16.msra.mxu0 %v683
    %850 = vmatmul.bf16.gmra.mxu0 %v154
    %v851 = vpop.f32.mrf.mxu0
    %v852 = vadd.f32 %v839, %v851
    %v853 = vpop.f32.mrf.mxu0
    %854 = vdwg.mxu0
    %855 = vmatpush.bf16.msra.mxu0 %v633
    %856 = vmatpush.bf16.msra.mxu0 %v630
    %857 = vmatpush.bf16.msra.mxu0 %v627
    %858 = vmatpush.bf16.msra.mxu0 %v624
    %859 = vmatpush.bf16.msra.mxu0 %v621
    %860 = vmatpush.bf16.msra.mxu0 %v618
    %861 = vmatpush.bf16.msra.mxu0 %v615
    %862 = vmatpush.bf16.msra.mxu0 %v612
    %863 = vmatmul.bf16.gmra.mxu0 %v151
    %v864 = vpop.f32.mrf.mxu0
    %v865 = vadd.f32 %v286, %v864
    %v866 = vpop.f32.mrf.mxu0
    %867 = vdwg.mxu0
    %868 = vmatpush.bf16.msra.mxu0 %v657
    %869 = vmatpush.bf16.msra.mxu0 %v654
    %870 = vmatpush.bf16.msra.mxu0 %v651
    %871 = vmatpush.bf16.msra.mxu0 %v648
    %872 = vmatpush.bf16.msra.mxu0 %v645
    %873 = vmatpush.bf16.msra.mxu0 %v642
    %874 = vmatpush.bf16.msra.mxu0 %v639
    %875 = vmatpush.bf16.msra.mxu0 %v636
    %876 = vmatmul.bf16.gmra.mxu0 %v152
    %v877 = vpop.f32.mrf.mxu0
    %v878 = vadd.f32 %v865, %v877
    %v879 = vpop.f32.mrf.mxu0
    %880 = vdwg.mxu0
    %881 = vmatpush.bf16.msra.mxu0 %v681
    %882 = vmatpush.bf16.msra.mxu0 %v678
    %883 = vmatpush.bf16.msra.mxu0 %v675
    %884 = vmatpush.bf16.msra.mxu0 %v672
    %885 = vmatpush.bf16.msra.mxu0 %v669
    %886 = vmatpush.bf16.msra.mxu0 %v666
    %887 = vmatpush.bf16.msra.mxu0 %v663
    %888 = vmatpush.bf16.msra.mxu0 %v660
    %889 = vmatmul.bf16.gmra.mxu0 %v153
    %v890 = vpop.f32.mrf.mxu0
    %v891 = vadd.f32 %v878, %v890
    %v892 = vpop.f32.mrf.mxu0
    %893 = vdwg.mxu0
    %894 = vmatpush.bf16.msra.mxu0 %v705
    %895 = vmatpush.bf16.msra.mxu0 %v702
    %896 = vmatpush.bf16.msra.mxu0 %v699
    %897 = vmatpush.bf16.msra.mxu0 %v696
    %898 = vmatpush.bf16.msra.mxu0 %v693
    %899 = vmatpush.bf16.msra.mxu0 %v690
    %900 = vmatpush.bf16.msra.mxu0 %v687
    %901 = vmatpush.bf16.msra.mxu0 %v684
    %902 = vmatmul.bf16.gmra.mxu0 %v154
    %v903 = vpop.f32.mrf.mxu0
    %v904 = vadd.f32 %v891, %v903
    %v905 = vpop.f32.mrf.mxu0
    %906 = vdwg.mxu0
    %907 = vmatpush.bf16.msra.mxu0 %v634
    %908 = vmatpush.bf16.msra.mxu0 %v631
    %909 = vmatpush.bf16.msra.mxu0 %v628
    %910 = vmatpush.bf16.msra.mxu0 %v625
    %911 = vmatpush.bf16.msra.mxu0 %v622
    %912 = vmatpush.bf16.msra.mxu0 %v619
    %913 = vmatpush.bf16.msra.mxu0 %v616
    %914 = vmatpush.bf16.msra.mxu0 %v613
    %915 = vmatmul.bf16.gmra.mxu0 %v151
    %v916 = vpop.f32.mrf.mxu0
    %v917 = vadd.f32 %v287, %v916
    %v918 = vpop.f32.mrf.mxu0
    %919 = vdwg.mxu0
    %920 = vmatpush.bf16.msra.mxu0 %v658
    %921 = vmatpush.bf16.msra.mxu0 %v655
    %922 = vmatpush.bf16.msra.mxu0 %v652
    %923 = vmatpush.bf16.msra.mxu0 %v649
    %924 = vmatpush.bf16.msra.mxu0 %v646
    %925 = vmatpush.bf16.msra.mxu0 %v643
    %926 = vmatpush.bf16.msra.mxu0 %v640
    %927 = vmatpush.bf16.msra.mxu0 %v637
    %928 = vmatmul.bf16.gmra.mxu0 %v152
    %v929 = vpop.f32.mrf.mxu0
    %v930 = vadd.f32 %v917, %v929
    %v931 = vpop.f32.mrf.mxu0
    %932 = vdwg.mxu0
    %933 = vmatpush.bf16.msra.mxu0 %v682
    %934 = vmatpush.bf16.msra.mxu0 %v679
    %935 = vmatpush.bf16.msra.mxu0 %v676
    %936 = vmatpush.bf16.msra.mxu0 %v673
    %937 = vmatpush.bf16.msra.mxu0 %v670
    %938 = vmatpush.bf16.msra.mxu0 %v667
    %939 = vmatpush.bf16.msra.mxu0 %v664
    %940 = vmatpush.bf16.msra.mxu0 %v661
    %941 = vmatmul.bf16.gmra.mxu0 %v153
    %v942 = vpop.f32.mrf.mxu0
    %v943 = vadd.f32 %v930, %v942
    %v944 = vpop.f32.mrf.mxu0
    %945 = vdwg.mxu0
    %946 = vmatpush.bf16.msra.mxu0 %v706
    %947 = vmatpush.bf16.msra.mxu0 %v703
    %948 = vmatpush.bf16.msra.mxu0 %v700
    %949 = vmatpush.bf16.msra.mxu0 %v697
    %950 = vmatpush.bf16.msra.mxu0 %v694
    %951 = vmatpush.bf16.msra.mxu0 %v691
    %952 = vmatpush.bf16.msra.mxu0 %v688
    %953 = vmatpush.bf16.msra.mxu0 %v685
    %954 = vmatmul.bf16.gmra.mxu0 %v154
    %v955 = vpop.f32.mrf.mxu0
    %v956 = vadd.f32 %v943, %v955
    %v957 = vpop.f32.mrf.mxu0
    %958 = vdwg.mxu0
    %v959 = vmax.f32 %v852, 0.0
    %v960 = vmax.f32 %v904, 0.0
    %v961 = vmax.f32 %v956, 0.0
    %v962 = vld [vmem:[%s5] sm:$0x7]
    %v964 = vperm.slane %v962, 0
    %v965 = vperm.slane %v962, 1
    %v966 = vperm.slane %v962, 2
    %v970 = vmul.f32 %v959, %v964
    %v971 = vmul.f32 %v960, %v965
    %v972 = vmul.f32 %v961, %v966
    %v973 = vadd.f32 %v970, %v971
    %v974 = vadd.f32 %v973, %v972
    %975 = vadd.xlane.f32.xlu0 %v974
    %v976 = vpop.xlane.xlu0 %975
    %v977 = vld [vmem:[#allocation2] sm:$0x1]
    %v979 = vperm.slane %v977, 0
    %v981 = vadd.f32 %v976, %v979
    %v982 = vtanh.pop %v981
    %v983 = vmul.f32 %v982, 2.0
    %985 = vset.pattern.permute.xlu0 0
    %986 = vperm.xlu0 %985, %v983
    %v987 = vpop.permute.xlu0 %986
    %989 = vst [vmem:[#allocation8] sm:$0xff] %v987
    // Predicated region
    $region38: #{tpu_custom_call.1} parent=1 // pred_check
      _
    $region39: #{tpu_custom_call.1} parent=1 // pred_check_branch
      %991 = sbr.rel (0) target = $region41
    $region40: #{tpu_custom_call.1} parent=1 // pred_region
      %993 = vsyncadd [#allocation5], 0
      %s995 = sshll.u32 [#allocation8], 4
      %s996 = int_to_ptr.vmem [resolvable:$true] %s995
      %s997 = sshll.u32 %s7, 4
      %s998 = int_to_ptr.hbm [resolvable:$true] %s997
      %1000 = dma.vmem_to_hbm [thread:$0]  %s996, 128, %s998, [#allocation5]
    $region41: #{tpu_custom_call.1} parent=1 // pred_fallthru
      _
    // Predicated region
    $region42: #{tpu_custom_call.1} parent=1 // pred_check
      _
    $region43: #{tpu_custom_call.1} parent=1 // pred_check_branch
      %1002 = sbr.rel (0) target = $region45
    $region44: #{tpu_custom_call.1} parent=1 // pred_region
      %1004 = dma.done [#allocation5], 128
    $region45: #{tpu_custom_call.1} parent=1 // pred_fallthru
      _
    %1005 = vsyncpa [#allocation4], 1
    %1006 = vsyncpa [#allocation7], 1
    %1007 = vsyncpa [#allocation5], 1

</llo_original>
